<compile_context>
chip_gen: v5e
topology: v5e:2x2
jax: 0.10.0
libtpu: 0.0.40
codegen_flags: <defaults>
</compile_context>

<pallas_src>
import jax
import jax.numpy as jnp
from jax.experimental import pallas as pl
from jax.experimental.pallas import tpu as pltpu


def _up_conv_kernel(x_ref, w_ref, b_ref, o_ref):
    """One (batch, row-tile) step of the k=2 / s=2 transposed conv.

    x_ref : (1, Cin, Ht, 2W)   input rows with every column duplicated
                               (lane c holds x[..., c // 2])
    w_ref : (Cin, Cout, 1, 4W) lane pattern: [ky=0 half | ky=1 half],
                               alternating kx inside each half
    b_ref : (Cout, 1, 4W)      bias broadcast along lanes
    o_ref : (1, Cout, Ht, 4W)  lanes [0, 2W) = output row 2i,
                               lanes [2W, 4W) = output row 2i+1
    """
    cin = x_ref.shape[1]
    acc = b_ref[...]                                    # (Cout, 1, 4W) — broadcasts over rows
    for ci in range(cin):                               # Cin is small -> fully unrolled VPU MACs
        xrow = x_ref[0, ci]                             # (Ht, 2W)
        xcat = jnp.concatenate([xrow, xrow], axis=-1)   # (Ht, 4W): same row feeds both ky halves
        acc = acc + xcat[None, :, :] * w_ref[ci]        # (Cout, Ht, 4W)
    o_ref[0] = acc.astype(o_ref.dtype)


def _pick_row_tile(H, Cin, Cout, W, budget_bytes=8 * 1024 * 1024):
    """Largest row tile whose double-buffered in+out blocks fit the VMEM budget."""
    per_row = (Cin * 2 * W + Cout * 4 * W) * 4 * 2      # f32, x2 for double buffering
    max_rows = max(1, budget_bytes // per_row)
    if H <= max_rows:
        return H
    best = 0
    t = 8
    while t <= max_rows:                                # multiple-of-8 keeps blocks (8,128)-legal
        if H % t == 0:
            best = t
        t += 8
    # TODO(synk): if H has no multiple-of-8 divisor under budget, fall back to full H.
    return best if best > 0 else H


def up_conv_pallas(x, weight, bias):
    """x: (N, Cin, H, W) f32 NCHW; weight: (Cin, Cout, 2, 2) (PyTorch layout); bias: (Cout,).

    Returns (N, Cout, 2H, 2W) f32 — identical to nn.ConvTranspose2d(k=2, s=2)(x).
    """
    N, Cin, H, W = x.shape
    Cout = weight.shape[1]
    x = x.astype(jnp.float32)
    w = weight.astype(jnp.float32)

    # Cheap, input-sized prep: duplicate each column so lane c aligns with output column c
    # (keeps the column interleave out of the kernel — no in-kernel lane relayout needed).
    xd = jnp.repeat(x, 2, axis=3)                       # (N, Cin, H, 2W)

    # Expand the 2x2 weights onto the output lane pattern: ky selects the half,
    # kx alternates within each half.
    wk = jnp.transpose(w, (2, 3, 0, 1))                 # (ky, kx, Cin, Cout)
    half0 = jnp.tile(jnp.stack([wk[0, 0], wk[0, 1]], axis=-1), (1, 1, W))   # (Cin, Cout, 2W)
    half1 = jnp.tile(jnp.stack([wk[1, 0], wk[1, 1]], axis=-1), (1, 1, W))   # (Cin, Cout, 2W)
    wcat = jnp.concatenate([half0, half1], axis=-1)[:, :, None, :]          # (Cin, Cout, 1, 4W)
    bl = jnp.broadcast_to(bias.astype(jnp.float32)[:, None, None], (Cout, 1, 4 * W))

    Ht = _pick_row_tile(H, Cin, Cout, W)
    grid = (N, H // Ht)

    out = pl.pallas_call(
        _up_conv_kernel,
        out_shape=jax.ShapeDtypeStruct((N, Cout, H, 4 * W), jnp.float32),
        grid=grid,
        in_specs=[
            pl.BlockSpec((1, Cin, Ht, 2 * W), lambda n, r: (n, 0, r, 0)),
            pl.BlockSpec((Cin, Cout, 1, 4 * W), lambda n, r: (0, 0, 0, 0)),
            pl.BlockSpec((Cout, 1, 4 * W), lambda n, r: (0, 0, 0)),
        ],
        out_specs=pl.BlockSpec((1, Cout, Ht, 4 * W), lambda n, r: (n, 0, r, 0)),
        compiler_params=pltpu.CompilerParams(
            dimension_semantics=("parallel", "parallel"),
            vmem_limit_bytes=32 * 1024 * 1024,
        ),
    )(xd, wcat, bl)

    # Free row-major reshape: for each input row i, lanes [0,2W) are output row 2i
    # and lanes [2W,4W) are output row 2i+1.
    return out.reshape(N, Cout, 2 * H, 2 * W)


def _reference(x, weight, bias):
    """Direct definition of ConvTranspose2d(k=2, s=2, pad=0) — no conv-convention ambiguity."""
    N, Cin, H, W = x.shape
    Cout = weight.shape[1]
    y = jnp.einsum('ncij,cokl->noikjl', x, weight)      # (N, Cout, H, 2, W, 2)
    y = y.reshape(N, Cout, 2 * H, 2 * W)
    return y + bias.reshape(1, Cout, 1, 1)


if __name__ == "__main__":
    key = jax.random.PRNGKey(0)
    kxv, kwv, kbv = jax.random.split(key, 3)

    N, CH_IN, CH_OUT, H, W = 2, 4, 8, 16, 16
    x = jax.random.normal(kxv, (N, CH_IN, H, W), jnp.float32)       # NCHW, like PyTorch
    scale = 1.0 / (CH_OUT * 4) ** 0.5                               # ConvTranspose2d default fan-in
    weight = jax.random.uniform(kwv, (CH_IN, CH_OUT, 2, 2), jnp.float32, -scale, scale)
    bias = jax.random.uniform(kbv, (CH_OUT,), jnp.float32, -scale, scale)

    out = jax.block_until_ready(jax.jit(up_conv_pallas)(x, weight, bias))
    ref = jax.block_until_ready(_reference(x, weight, bias))

    assert out.shape == (N, CH_OUT, 2 * H, 2 * W)
    assert float(jnp.max(jnp.abs(out - ref))) < 1e-5, "mismatch vs reference"
    print("KERNEL_OK")
</pallas_src>

<mosaic_0001>
module attributes {stable_mosaic.version = 11 : i64} {
  func.func @_up_conv_kernel(%arg0: i32, %arg1: i32, %arg2: memref<1x4x16x32xf32, #tpu.memory_space<vmem>>, %arg3: memref<4x8x1x64xf32, #tpu.memory_space<vmem>>, %arg4: memref<8x1x64xf32, #tpu.memory_space<vmem>>, %arg5: memref<1x8x16x64xf32, #tpu.memory_space<vmem>>) attributes {dimension_semantics = [#tpu.dimension_semantics<parallel>, #tpu.dimension_semantics<parallel>], iteration_bounds = array<i64: 2, 1>, scalar_prefetch = 0 : i64, scratch_operands = 0 : i64, tpu.core_type = #tpu.core_type<tc>, window_params = [{transform_indices = @transform_0, window_bounds = array<i64: 1, 4, 16, 32>}, {pipeline_mode = #tpu.pipeline_mode<synchronous>, transform_indices = @transform_1, window_bounds = array<i64: 4, 8, 1, 64>}, {pipeline_mode = #tpu.pipeline_mode<synchronous>, transform_indices = @transform_2, window_bounds = array<i64: 8, 1, 64>}, {transform_indices = @transform_3, window_bounds = array<i64: 1, 8, 16, 64>}]} {
    %c0 = arith.constant 0 : index
    %c0_0 = arith.constant 0 : index
    %c0_1 = arith.constant 0 : index
    %0 = vector.load %arg4[%c0, %c0_0, %c0_1] : memref<8x1x64xf32, #tpu.memory_space<vmem>>, vector<8x1x64xf32>
    %c0_2 = arith.constant 0 : index
    %c0_3 = arith.constant 0 : index
    %c0_4 = arith.constant 0 : index
    %c0_5 = arith.constant 0 : index
    %1 = vector.load %arg2[%c0_2, %c0_3, %c0_4, %c0_5] : memref<1x4x16x32xf32, #tpu.memory_space<vmem>>, vector<1x1x16x32xf32>
    %2 = vector.shape_cast %1 : vector<1x1x16x32xf32> to vector<16x32xf32>
    %3 = tpu.concatenate %2, %2 in 1 : vector<16x32xf32>, vector<16x32xf32> -> vector<16x64xf32>
    %4 = vector.shape_cast %3 : vector<16x64xf32> to vector<1x16x64xf32>
    %c0_6 = arith.constant 0 : index
    %c0_7 = arith.constant 0 : index
    %c0_8 = arith.constant 0 : index
    %c0_9 = arith.constant 0 : index
    %5 = vector.load %arg3[%c0_6, %c0_7, %c0_8, %c0_9] : memref<4x8x1x64xf32, #tpu.memory_space<vmem>>, vector<1x8x1x64xf32>
    %6 = vector.shape_cast %5 : vector<1x8x1x64xf32> to vector<8x1x64xf32>
    %7 = vector.broadcast %4 : vector<1x16x64xf32> to vector<8x16x64xf32>
    %8 = vector.broadcast %6 : vector<8x1x64xf32> to vector<8x16x64xf32>
    %9 = arith.mulf %7, %8 : vector<8x16x64xf32>
    %10 = vector.broadcast %0 : vector<8x1x64xf32> to vector<8x16x64xf32>
    %11 = arith.addf %10, %9 : vector<8x16x64xf32>
    %c0_10 = arith.constant 0 : index
    %c1 = arith.constant 1 : index
    %c0_11 = arith.constant 0 : index
    %c0_12 = arith.constant 0 : index
    %12 = vector.load %arg2[%c0_10, %c1, %c0_11, %c0_12] : memref<1x4x16x32xf32, #tpu.memory_space<vmem>>, vector<1x1x16x32xf32>
    %13 = vector.shape_cast %12 : vector<1x1x16x32xf32> to vector<16x32xf32>
    %14 = tpu.concatenate %13, %13 in 1 : vector<16x32xf32>, vector<16x32xf32> -> vector<16x64xf32>
    %15 = vector.shape_cast %14 : vector<16x64xf32> to vector<1x16x64xf32>
    %c1_13 = arith.constant 1 : index
    %c0_14 = arith.constant 0 : index
    %c0_15 = arith.constant 0 : index
    %c0_16 = arith.constant 0 : index
    %16 = vector.load %arg3[%c1_13, %c0_14, %c0_15, %c0_16] : memref<4x8x1x64xf32, #tpu.memory_space<vmem>>, vector<1x8x1x64xf32>
    %17 = vector.shape_cast %16 : vector<1x8x1x64xf32> to vector<8x1x64xf32>
    %18 = vector.broadcast %15 : vector<1x16x64xf32> to vector<8x16x64xf32>
    %19 = vector.broadcast %17 : vector<8x1x64xf32> to vector<8x16x64xf32>
    %20 = arith.mulf %18, %19 : vector<8x16x64xf32>
    %21 = arith.addf %11, %20 : vector<8x16x64xf32>
    %c0_17 = arith.constant 0 : index
    %c2 = arith.constant 2 : index
    %c0_18 = arith.constant 0 : index
    %c0_19 = arith.constant 0 : index
    %22 = vector.load %arg2[%c0_17, %c2, %c0_18, %c0_19] : memref<1x4x16x32xf32, #tpu.memory_space<vmem>>, vector<1x1x16x32xf32>
    %23 = vector.shape_cast %22 : vector<1x1x16x32xf32> to vector<16x32xf32>
    %24 = tpu.concatenate %23, %23 in 1 : vector<16x32xf32>, vector<16x32xf32> -> vector<16x64xf32>
    %25 = vector.shape_cast %24 : vector<16x64xf32> to vector<1x16x64xf32>
    %c2_20 = arith.constant 2 : index
    %c0_21 = arith.constant 0 : index
    %c0_22 = arith.constant 0 : index
    %c0_23 = arith.constant 0 : index
    %26 = vector.load %arg3[%c2_20, %c0_21, %c0_22, %c0_23] : memref<4x8x1x64xf32, #tpu.memory_space<vmem>>, vector<1x8x1x64xf32>
    %27 = vector.shape_cast %26 : vector<1x8x1x64xf32> to vector<8x1x64xf32>
    %28 = vector.broadcast %25 : vector<1x16x64xf32> to vector<8x16x64xf32>
    %29 = vector.broadcast %27 : vector<8x1x64xf32> to vector<8x16x64xf32>
    %30 = arith.mulf %28, %29 : vector<8x16x64xf32>
    %31 = arith.addf %21, %30 : vector<8x16x64xf32>
    %c0_24 = arith.constant 0 : index
    %c3 = arith.constant 3 : index
    %c0_25 = arith.constant 0 : index
    %c0_26 = arith.constant 0 : index
    %32 = vector.load %arg2[%c0_24, %c3, %c0_25, %c0_26] : memref<1x4x16x32xf32, #tpu.memory_space<vmem>>, vector<1x1x16x32xf32>
    %33 = vector.shape_cast %32 : vector<1x1x16x32xf32> to vector<16x32xf32>
    %34 = tpu.concatenate %33, %33 in 1 : vector<16x32xf32>, vector<16x32xf32> -> vector<16x64xf32>
    %35 = vector.shape_cast %34 : vector<16x64xf32> to vector<1x16x64xf32>
    %c3_27 = arith.constant 3 : index
    %c0_28 = arith.constant 0 : index
    %c0_29 = arith.constant 0 : index
    %c0_30 = arith.constant 0 : index
    %36 = vector.load %arg3[%c3_27, %c0_28, %c0_29, %c0_30] : memref<4x8x1x64xf32, #tpu.memory_space<vmem>>, vector<1x8x1x64xf32>
    %37 = vector.shape_cast %36 : vector<1x8x1x64xf32> to vector<8x1x64xf32>
    %38 = vector.broadcast %35 : vector<1x16x64xf32> to vector<8x16x64xf32>
    %39 = vector.broadcast %37 : vector<8x1x64xf32> to vector<8x16x64xf32>
    %40 = arith.mulf %38, %39 : vector<8x16x64xf32>
    %41 = arith.addf %31, %40 : vector<8x16x64xf32>
    %c0_31 = arith.constant 0 : index
    %c0_32 = arith.constant 0 : index
    %c0_33 = arith.constant 0 : index
    %c0_34 = arith.constant 0 : index
    %42 = vector.load %arg5[%c0_31, %c0_32, %c0_33, %c0_34] : memref<1x8x16x64xf32, #tpu.memory_space<vmem>>, vector<1x8x16x64xf32>
    %43 = vector.shape_cast %42 : vector<1x8x16x64xf32> to vector<8x16x64xf32>
    %44 = vector.shape_cast %41 : vector<8x16x64xf32> to vector<1x8x16x64xf32>
    tpu.vector_store %arg5[%c0_31, %c0_32, %c0_33, %c0_34], %44 {strides = array<i32>} : memref<1x8x16x64xf32, #tpu.memory_space<vmem>>, vector<1x8x16x64xf32>,
    return
  }
  func.func @transform_0(%arg0: i32, %arg1: i32) -> (i32, i32, i32, i32) {
    %c0_i32 = arith.constant 0 : i32
    %c0_i32_0 = arith.constant 0 : i32
    %c0_i32_1 = arith.constant 0 : i32
    return %arg0, %c0_i32, %arg1, %c0_i32_0 : i32, i32, i32, i32
  }
  func.func @transform_1(%arg0: i32, %arg1: i32) -> (i32, i32, i32, i32) {
    %c0_i32 = arith.constant 0 : i32
    %c0_i32_0 = arith.constant 0 : i32
    %c0_i32_1 = arith.constant 0 : i32
    %c0_i32_2 = arith.constant 0 : i32
    %c0_i32_3 = arith.constant 0 : i32
    return %c0_i32, %c0_i32_0, %c0_i32_1, %c0_i32_2 : i32, i32, i32, i32
  }
  func.func @transform_2(%arg0: i32, %arg1: i32) -> (i32, i32, i32) {
    %c0_i32 = arith.constant 0 : i32
    %c0_i32_0 = arith.constant 0 : i32
    %c0_i32_1 = arith.constant 0 : i32
    %c0_i32_2 = arith.constant 0 : i32
    return %c0_i32, %c0_i32_0, %c0_i32_1 : i32, i32, i32
  }
  func.func @transform_3(%arg0: i32, %arg1: i32) -> (i32, i32, i32, i32) {
    %c0_i32 = arith.constant 0 : i32
    %c0_i32_0 = arith.constant 0 : i32
    %c0_i32_1 = arith.constant 0 : i32
    return %arg0, %c0_i32, %arg1, %c0_i32_0 : i32, i32, i32, i32
  }
}

</mosaic_0001>

<llo_original>
// kernel: up_conv_pallas.1
$region0: #{up_conv_pallas.1}
  #allocation0 [shape = 'u32[]', space=smem, size = 0x4, offset = 0x4, fixed_abs, tag = 'smem constant byte address 0x4 - core index']
  #allocation1 [shape = 'u32[72,128]{1,0:T(1,128)}', space=vmem, size = 0x9000, scoped, tag = 'internal scratch']
  %s0 = inlined_call_operand.vmem [shape: f32[2,4,16,32], index: 0, kind: input, shape index: {}]
  %s1 = inlined_call_operand.vmem [shape: f32[4,8,1,64], index: 1, kind: input, shape index: {}]
  %s2 = inlined_call_operand.vmem [shape: f32[8,1,64], index: 2, kind: input, shape index: {}]
  %s3 = inlined_call_operand.vmem [shape: f32[2,8,16,64], index: 3, kind: output, shape index: {}]
  %s4 = sld [smem:[#allocation0]]
  $region45: #{up_conv_pallas.1} parent=0
    _
  %s6 = ssub.s32 1, %s4
  %s7 = scalar_select 0, %s6, %s4
  loop: start=0, step=1, limit=4
  $region2: #{up_conv_pallas.1} parent=0 // loop_pre_header
    _
  $region3: #{up_conv_pallas.1} parent=0 // loop_header
    %s9 = sphi 0, %s13
    %p10 = scmp.ge.s32.totalorder %s9, 4
    %s16 = sphi 0, %s28
    %s17 = sphi 0, %s24
    %s18 = sphi 0, %s16
    %s19 = sphi 0, %s17
    %s20 = sphi 0, %s18
    %s21 = sphi 0, %s19
    %s33 = sphi 0, %s35
    %s36 = sphi 0, %s33
    %s37 = sphi 0, %s36
    %s53 = sphi 0, %s37
    %s57 = sphi 0, %s57
    %s59 = sphi 0, %s57
    %s60 = sphi 0, %s59
    %s74 = sphi 0, %s60
    %s78 = sphi 0, %s78
    %s80 = sphi 0, %s78
    %s81 = sphi 0, %s80
    %s95 = sphi 0, %s81
    %s103 = sphi 0, %s105
    %s106 = sphi 0, %s103
    %s107 = sphi 0, %s106
    %s123 = sphi 0, %s107
  $region4: #{up_conv_pallas.1} parent=0 // loop_header_branch
    %12 = sbr.rel (%p10) target = $region8
  $region5: #{up_conv_pallas.1} parent=0 // loop_body
    %s14 = ssub.s32 %s9, 1
    %s15 = ssub.s32 %s9, 2
    %s22 = sadd.s32 1, %s17
    %p23 = scmp.ge.s32.totalorder %s22, 1
    %s24 = scalar_select %p23, 0, %s22
    %s25 = sadd.s32 1, %s16
    %s26 = scalar_select %p23, %s25, %s16
    %p27 = scmp.ge.s32.totalorder %s26, 2
    %s28 = scalar_select %p27, 0, %s26
    %s29 = ssub.s32 %s16, %s28
    %s30 = ssub.s32 %s17, %s24
    %s31 = sor.u32 %s29, %s30
    %p32 = scmp.eq.s32.totalorder %s31, 0
    %s34 = sadd.s32 %s33, 1
    %s35 = scalar_select %p32, %s33, %s34
    %p38 = pneg %p32
    %p39 = scmp.eq.s32.totalorder %s9, 1
    %p40 = por %p38, %p39
    %p41 = scmp.ne.s32.totalorder %s33, %s36
    %p42 = scmp.eq.s32.totalorder %s9, 0
    %p43 = por %p41, %p42
    %p44 = scmp.ne.s32.totalorder %s33, %s36
    %p45 = scmp.eq.s32.totalorder %s14, 1
    %p46 = por %p44, %p45
    %p47 = scmp.ne.s32.totalorder %s36, %s37
    %p48 = scmp.eq.s32.totalorder %s14, 0
    %p49 = por %p47, %p48
    %p50 = scmp.ne.s32.totalorder %s36, %s37
    %p51 = scmp.eq.s32.totalorder %s15, 1
    %p52 = por %p50, %p51
    %p54 = scmp.ne.s32.totalorder %s37, %s53
    %p55 = scmp.eq.s32.totalorder %s15, 0
    %p56 = por %p54, %p55
    %s58 = sadd.s32 %s57, 1
    %p61 = scmp.eq.s32.totalorder %s9, 1
    %p62 = scmp.ne.s32.totalorder %s57, %s59
    %p63 = scmp.eq.s32.totalorder %s9, 0
    %p64 = por %p62, %p63
    %p65 = scmp.ne.s32.totalorder %s57, %s59
    %p66 = scmp.eq.s32.totalorder %s14, 1
    %p67 = por %p65, %p66
    %p68 = scmp.ne.s32.totalorder %s59, %s60
    %p69 = scmp.eq.s32.totalorder %s14, 0
    %p70 = por %p68, %p69
    %p71 = scmp.ne.s32.totalorder %s59, %s60
    %p72 = scmp.eq.s32.totalorder %s15, 1
    %p73 = por %p71, %p72
    %p75 = scmp.ne.s32.totalorder %s60, %s74
    %p76 = scmp.eq.s32.totalorder %s15, 0
    %p77 = por %p75, %p76
    %s79 = sadd.s32 %s78, 1
    %p82 = scmp.eq.s32.totalorder %s9, 1
    %p83 = scmp.ne.s32.totalorder %s78, %s80
    %p84 = scmp.eq.s32.totalorder %s9, 0
    %p85 = por %p83, %p84
    %p86 = scmp.ne.s32.totalorder %s78, %s80
    %p87 = scmp.eq.s32.totalorder %s14, 1
    %p88 = por %p86, %p87
    %p89 = scmp.ne.s32.totalorder %s80, %s81
    %p90 = scmp.eq.s32.totalorder %s14, 0
    %p91 = por %p89, %p90
    %p92 = scmp.ne.s32.totalorder %s80, %s81
    %p93 = scmp.eq.s32.totalorder %s15, 1
    %p94 = por %p92, %p93
    %p96 = scmp.ne.s32.totalorder %s81, %s95
    %p97 = scmp.eq.s32.totalorder %s15, 0
    %p98 = por %p96, %p97
    %s99 = ssub.s32 %s16, %s28
    %s100 = ssub.s32 %s17, %s24
    %s101 = sor.u32 %s99, %s100
    %p102 = scmp.eq.s32.totalorder %s101, 0
    %s104 = sadd.s32 %s103, 1
    %s105 = scalar_select %p102, %s103, %s104
    %p108 = pneg %p102
    %p109 = scmp.eq.s32.totalorder %s9, 1
    %p110 = por %p108, %p109
    %p111 = scmp.ne.s32.totalorder %s103, %s106
    %p112 = scmp.eq.s32.totalorder %s9, 0
    %p113 = por %p111, %p112
    %p114 = scmp.ne.s32.totalorder %s103, %s106
    %p115 = scmp.eq.s32.totalorder %s14, 1
    %p116 = por %p114, %p115
    %p117 = scmp.ne.s32.totalorder %s106, %s107
    %p118 = scmp.eq.s32.totalorder %s14, 0
    %p119 = por %p117, %p118
    %p120 = scmp.ne.s32.totalorder %s106, %s107
    %p121 = scmp.eq.s32.totalorder %s15, 1
    %p122 = por %p120, %p121
    %p124 = scmp.ne.s32.totalorder %s107, %s123
    %p125 = scmp.eq.s32.totalorder %s15, 0
    %p126 = por %p124, %p125
    %p127 = scmp.le.s32.totalorder 1, %s9
    %p128 = scmp.lt.s32.totalorder %s9, 3
    %p129 = pnand %p127, %p128
    %p130 = pneg %p129
    // Predicated region
    $region9: #{up_conv_pallas.1} parent=5 // pred_check
      _
    $region10: #{up_conv_pallas.1} parent=5 // pred_check_branch
      %132 = sbr.rel (%p129) target = $region12
    $region11: #{up_conv_pallas.1} parent=5 // pred_region
      %s133 = ssub.s32 %s9, 1
      // Predicated region
      $region13: #{up_conv_pallas.1} parent=11 // pred_check
        %p134 = pneg %p70
      $region14: #{up_conv_pallas.1} parent=11 // pred_check_branch
        %136 = sbr.rel (%p134) target = $region16
      $region15: #{up_conv_pallas.1} parent=11 // pred_region
        _
      $region16: #{up_conv_pallas.1} parent=11 // pred_fallthru
        _
      // Predicated region
      $region17: #{up_conv_pallas.1} parent=11 // pred_check
        %p137 = pneg %p91
      $region18: #{up_conv_pallas.1} parent=11 // pred_check_branch
        %139 = sbr.rel (%p137) target = $region20
      $region19: #{up_conv_pallas.1} parent=11 // pred_region
        _
      $region20: #{up_conv_pallas.1} parent=11 // pred_fallthru
        _
    $region12: #{up_conv_pallas.1} parent=5 // pred_fallthru
      _
    %p140 = scmp.lt.s32.totalorder %s9, 2
    // Predicated region
    $region21: #{up_conv_pallas.1} parent=5 // pred_check
      %p141 = pneg %p140
    $region22: #{up_conv_pallas.1} parent=5 // pred_check_branch
      %143 = sbr.rel (%p141) target = $region24
    $region23: #{up_conv_pallas.1} parent=5 // pred_region
      // Predicated region
      $region25: #{up_conv_pallas.1} parent=23 // pred_check
        %p144 = pneg %p43
      $region26: #{up_conv_pallas.1} parent=23 // pred_check_branch
        %146 = sbr.rel (%p144) target = $region28
      $region27: #{up_conv_pallas.1} parent=23 // pred_region
        %s147 = smul.u32 2, %s17
        %p148 = scmp.lt.s32.totalorder %s16, 1
        %s149 = scalar_select %p148, %s16, 1
        %p150 = scmp.lt.s32.totalorder %s147, 1
        %s151 = scalar_select %p150, %s147, 1
        %s152 = smul.addr %s149, 8
        %s153 = sadd.s32 %s151, %s152
        %s154 = smul.addr %s153, 8
        %s155 = scalar_lea.vmem %s0, %s154
        %s156 = smul.u32 2, %s17
      $region28: #{up_conv_pallas.1} parent=23 // pred_fallthru
        _
    $region24: #{up_conv_pallas.1} parent=5 // pred_fallthru
      _
    %p157 = scmp.le.s32.totalorder 1, %s9
    %p158 = scmp.lt.s32.totalorder %s9, 3
    %p159 = pnand %p157, %p158
    %p160 = pneg %p159
    // Predicated region
    $region29: #{up_conv_pallas.1} parent=5 // pred_check
      _
    $region30: #{up_conv_pallas.1} parent=5 // pred_check_branch
      %162 = sbr.rel (%p159) target = $region32
    $region31: #{up_conv_pallas.1} parent=5 // pred_region
      %s163 = ssub.s32 %s9, 1
      %s164 = smul.u32 2, %s19
      %p165 = scmp.lt.s32.totalorder %s18, 1
      %s166 = scalar_select %p165, %s18, 1
      %p167 = scmp.lt.s32.totalorder %s164, 1
      %s168 = scalar_select %p167, %s164, 1
      %s169 = smul.addr %s166, 8
      %s170 = sadd.s32 %s168, %s169
      %s171 = smul.addr %s170, 8
      %s172 = scalar_lea.vmem %s0, %s171
      %p173 = pneg %p49
      %p174 = pneg %p46
      %p175 = pneg %p70
      %p176 = pneg %p67
      %p177 = pneg %p91
      %p178 = pneg %p88
      %p179 = pneg %p119
      %p180 = pneg %p116
      %s181 = smul.u32 2, %s19
      %p182 = scmp.lt.s32.totalorder %s18, 1
      %s183 = scalar_select %p182, %s18, 1
      %p184 = scmp.lt.s32.totalorder %s181, 1
      %s185 = scalar_select %p184, %s181, 1
      %s186 = smul.addr %s183, 16
      %s187 = sadd.s32 %s185, %s186
      %s188 = smul.addr %s187, 8
      %s189 = scalar_lea.vmem %s3, %s188
      %s190 = smul.u32 2, %s19
      %p191 = scmp.lt.s32.totalorder %s18, 1
      %s192 = scalar_select %p191, %s18, 1
      %p193 = scmp.lt.s32.totalorder %s190, 1
      %s194 = scalar_select %p193, %s190, 1
      %s195 = smul.addr %s192, 8
      %s196 = sadd.s32 %s194, %s195
      %s197 = smul.addr %s196, 8
      %s198 = scalar_lea.vmem %s0, %s197
      %s199 = smul.u32 2, %s19
      %s200 = smul.u32 2, %s19
      %p201 = scmp.lt.s32.totalorder %s18, 1
      %s202 = scalar_select %p201, %s18, 1
      %p203 = scmp.lt.s32.totalorder %s200, 1
      %s204 = scalar_select %p203, %s200, 1
      %s205 = smul.addr %s202, 16
      %s206 = sadd.s32 %s204, %s205
      %s207 = smul.addr %s206, 8
      %s208 = scalar_lea.vmem %s3, %s207
      %s209 = smul.u32 2, %s19
      %v210 = vld [vmem:[%s2] sm:$0x1]
      %v211 = vld [vmem:[%s2 + $0x1] sm:$0x1]
      %v212 = vld [vmem:[%s2 + $0x2] sm:$0x1]
      %v213 = vld [vmem:[%s2 + $0x3] sm:$0x1]
      %v214 = vld [vmem:[%s2 + $0x4] sm:$0x1]
      %v215 = vld [vmem:[%s2 + $0x5] sm:$0x1]
      %v216 = vld [vmem:[%s2 + $0x6] sm:$0x1]
      %v217 = vld [vmem:[%s2 + $0x7] sm:$0x1]
      %v218 = vld [vmem:[%s198] sm:$0xff]
      %v219 = vld [vmem:[%s198 + $0x8] sm:$0xff]
      %222 = vrot.lane.b32.xlu0 %v218, 32
      %v223 = vpop.permute.xlu0 %222
      %224 = vrot.lane.b32.xlu0 %v219, 32
      %v225 = vpop.permute.xlu0 %224
      %vm228 = vcmask 261120
      %v229 = vsel %vm228, %v218, %v223
      %v230 = vsel %vm228, %v219, %v225
      %v231 = vld [vmem:[%s1] sm:$0x1]
      %v232 = vld [vmem:[%s1 + $0x1] sm:$0x1]
      %v233 = vld [vmem:[%s1 + $0x2] sm:$0x1]
      %v234 = vld [vmem:[%s1 + $0x3] sm:$0x1]
      %v235 = vld [vmem:[%s1 + $0x4] sm:$0x1]
      %v236 = vld [vmem:[%s1 + $0x5] sm:$0x1]
      %v237 = vld [vmem:[%s1 + $0x6] sm:$0x1]
      %v238 = vld [vmem:[%s1 + $0x7] sm:$0x1]
      %v247 = vperm.slane %v231, 0
      %v248 = vperm.slane %v232, 0
      %v249 = vperm.slane %v233, 0
      %v250 = vperm.slane %v234, 0
      %v251 = vperm.slane %v235, 0
      %v252 = vperm.slane %v236, 0
      %v253 = vperm.slane %v237, 0
      %v254 = vperm.slane %v238, 0
      %v263 = vmul.f32 %v229, %v247
      %v264 = vmul.f32 %v230, %v247
      %v265 = vmul.f32 %v229, %v248
      %v266 = vmul.f32 %v230, %v248
      %v267 = vmul.f32 %v229, %v249
      %v268 = vmul.f32 %v230, %v249
      %v269 = vmul.f32 %v229, %v250
      %v270 = vmul.f32 %v230, %v250
      %v271 = vmul.f32 %v229, %v251
      %v272 = vmul.f32 %v230, %v251
      %v273 = vmul.f32 %v229, %v252
      %v274 = vmul.f32 %v230, %v252
      %v275 = vmul.f32 %v229, %v253
      %v276 = vmul.f32 %v230, %v253
      %v277 = vmul.f32 %v229, %v254
      %v278 = vmul.f32 %v230, %v254
      %v287 = vperm.slane %v210, 0
      %v288 = vperm.slane %v211, 0
      %v289 = vperm.slane %v212, 0
      %v290 = vperm.slane %v213, 0
      %v291 = vperm.slane %v214, 0
      %v292 = vperm.slane %v215, 0
      %v293 = vperm.slane %v216, 0
      %v294 = vperm.slane %v217, 0
      %v303 = vadd.f32 %v287, %v263
      %v304 = vadd.f32 %v287, %v264
      %v305 = vadd.f32 %v288, %v265
      %v306 = vadd.f32 %v288, %v266
      %v307 = vadd.f32 %v289, %v267
      %v308 = vadd.f32 %v289, %v268
      %v309 = vadd.f32 %v290, %v269
      %v310 = vadd.f32 %v290, %v270
      %v311 = vadd.f32 %v291, %v271
      %v312 = vadd.f32 %v291, %v272
      %v313 = vadd.f32 %v292, %v273
      %v314 = vadd.f32 %v292, %v274
      %v315 = vadd.f32 %v293, %v275
      %v316 = vadd.f32 %v293, %v276
      %v317 = vadd.f32 %v294, %v277
      %v318 = vadd.f32 %v294, %v278
      %s319 = scalar_lea.vmem %s198, 16
      %v320 = vld [vmem:[%s319] sm:$0xff]
      %v321 = vld [vmem:[%s319 + $0x8] sm:$0xff]
      %324 = vrot.lane.b32.xlu0 %v320, 32
      %v325 = vpop.permute.xlu0 %324
      %326 = vrot.lane.b32.xlu0 %v321, 32
      %v327 = vpop.permute.xlu0 %326
      %v330 = vsel %vm228, %v320, %v325
      %v331 = vsel %vm228, %v321, %v327
      %s332 = scalar_lea.vmem %s1, 8
      %v333 = vld [vmem:[%s332] sm:$0x1]
      %v334 = vld [vmem:[%s332 + $0x1] sm:$0x1]
      %v335 = vld [vmem:[%s332 + $0x2] sm:$0x1]
      %v336 = vld [vmem:[%s332 + $0x3] sm:$0x1]
      %v337 = vld [vmem:[%s332 + $0x4] sm:$0x1]
      %v338 = vld [vmem:[%s332 + $0x5] sm:$0x1]
      %v339 = vld [vmem:[%s332 + $0x6] sm:$0x1]
      %v340 = vld [vmem:[%s332 + $0x7] sm:$0x1]
      %v349 = vperm.slane %v333, 0
      %v350 = vperm.slane %v334, 0
      %v351 = vperm.slane %v335, 0
      %v352 = vperm.slane %v336, 0
      %v353 = vperm.slane %v337, 0
      %v354 = vperm.slane %v338, 0
      %v355 = vperm.slane %v339, 0
      %v356 = vperm.slane %v340, 0
      %v365 = vmul.f32 %v330, %v349
      %v366 = vmul.f32 %v331, %v349
      %v367 = vmul.f32 %v330, %v350
      %v368 = vmul.f32 %v331, %v350
      %v369 = vmul.f32 %v330, %v351
      %v370 = vmul.f32 %v331, %v351
      %v371 = vmul.f32 %v330, %v352
      %v372 = vmul.f32 %v331, %v352
      %v373 = vmul.f32 %v330, %v353
      %v374 = vmul.f32 %v331, %v353
      %v375 = vmul.f32 %v330, %v354
      %v376 = vmul.f32 %v331, %v354
      %v377 = vmul.f32 %v330, %v355
      %v378 = vmul.f32 %v331, %v355
      %v379 = vmul.f32 %v330, %v356
      %v380 = vmul.f32 %v331, %v356
      %v381 = vadd.f32 %v303, %v365
      %v382 = vadd.f32 %v304, %v366
      %v383 = vadd.f32 %v305, %v367
      %v384 = vadd.f32 %v306, %v368
      %v385 = vadd.f32 %v307, %v369
      %v386 = vadd.f32 %v308, %v370
      %v387 = vadd.f32 %v309, %v371
      %v388 = vadd.f32 %v310, %v372
      %v389 = vadd.f32 %v311, %v373
      %v390 = vadd.f32 %v312, %v374
      %v391 = vadd.f32 %v313, %v375
      %v392 = vadd.f32 %v314, %v376
      %v393 = vadd.f32 %v315, %v377
      %v394 = vadd.f32 %v316, %v378
      %v395 = vadd.f32 %v317, %v379
      %v396 = vadd.f32 %v318, %v380
      %s397 = scalar_lea.vmem %s198, 32
      %v398 = vld [vmem:[%s397] sm:$0xff]
      %v399 = vld [vmem:[%s397 + $0x8] sm:$0xff]
      %402 = vrot.lane.b32.xlu0 %v398, 32
      %v403 = vpop.permute.xlu0 %402
      %404 = vrot.lane.b32.xlu0 %v399, 32
      %v405 = vpop.permute.xlu0 %404
      %v408 = vsel %vm228, %v398, %v403
      %v409 = vsel %vm228, %v399, %v405
      %s410 = scalar_lea.vmem %s1, 16
      %v411 = vld [vmem:[%s410] sm:$0x1]
      %v412 = vld [vmem:[%s410 + $0x1] sm:$0x1]
      %v413 = vld [vmem:[%s410 + $0x2] sm:$0x1]
      %v414 = vld [vmem:[%s410 + $0x3] sm:$0x1]
      %v415 = vld [vmem:[%s410 + $0x4] sm:$0x1]
      %v416 = vld [vmem:[%s410 + $0x5] sm:$0x1]
      %v417 = vld [vmem:[%s410 + $0x6] sm:$0x1]
      %v418 = vld [vmem:[%s410 + $0x7] sm:$0x1]
      %v427 = vperm.slane %v411, 0
      %v428 = vperm.slane %v412, 0
      %v429 = vperm.slane %v413, 0
      %v430 = vperm.slane %v414, 0
      %v431 = vperm.slane %v415, 0
      %v432 = vperm.slane %v416, 0
      %v433 = vperm.slane %v417, 0
      %v434 = vperm.slane %v418, 0
      %v443 = vmul.f32 %v408, %v427
      %v444 = vmul.f32 %v409, %v427
      %v445 = vmul.f32 %v408, %v428
      %v446 = vmul.f32 %v409, %v428
      %v447 = vmul.f32 %v408, %v429
      %v448 = vmul.f32 %v409, %v429
      %v449 = vmul.f32 %v408, %v430
      %v450 = vmul.f32 %v409, %v430
      %v451 = vmul.f32 %v408, %v431
      %v452 = vmul.f32 %v409, %v431
      %v453 = vmul.f32 %v408, %v432
      %v454 = vmul.f32 %v409, %v432
      %v455 = vmul.f32 %v408, %v433
      %v456 = vmul.f32 %v409, %v433
      %v457 = vmul.f32 %v408, %v434
      %v458 = vmul.f32 %v409, %v434
      %v459 = vadd.f32 %v381, %v443
      %v460 = vadd.f32 %v382, %v444
      %v461 = vadd.f32 %v383, %v445
      %v462 = vadd.f32 %v384, %v446
      %v463 = vadd.f32 %v385, %v447
      %v464 = vadd.f32 %v386, %v448
      %v465 = vadd.f32 %v387, %v449
      %v466 = vadd.f32 %v388, %v450
      %v467 = vadd.f32 %v389, %v451
      %v468 = vadd.f32 %v390, %v452
      %v469 = vadd.f32 %v391, %v453
      %v470 = vadd.f32 %v392, %v454
      %v471 = vadd.f32 %v393, %v455
      %v472 = vadd.f32 %v394, %v456
      %v473 = vadd.f32 %v395, %v457
      %v474 = vadd.f32 %v396, %v458
      %s475 = scalar_lea.vmem %s198, 48
      %v476 = vld [vmem:[%s475] sm:$0xff]
      %v477 = vld [vmem:[%s475 + $0x8] sm:$0xff]
      %480 = vrot.lane.b32.xlu0 %v476, 32
      %v481 = vpop.permute.xlu0 %480
      %482 = vrot.lane.b32.xlu0 %v477, 32
      %v483 = vpop.permute.xlu0 %482
      %v486 = vsel %vm228, %v476, %v481
      %v487 = vsel %vm228, %v477, %v483
      %s488 = scalar_lea.vmem %s1, 24
      %v489 = vld [vmem:[%s488] sm:$0x1]
      %v490 = vld [vmem:[%s488 + $0x1] sm:$0x1]
      %v491 = vld [vmem:[%s488 + $0x2] sm:$0x1]
      %v492 = vld [vmem:[%s488 + $0x3] sm:$0x1]
      %v493 = vld [vmem:[%s488 + $0x4] sm:$0x1]
      %v494 = vld [vmem:[%s488 + $0x5] sm:$0x1]
      %v495 = vld [vmem:[%s488 + $0x6] sm:$0x1]
      %v496 = vld [vmem:[%s488 + $0x7] sm:$0x1]
      %v505 = vperm.slane %v489, 0
      %v506 = vperm.slane %v490, 0
      %v507 = vperm.slane %v491, 0
      %v508 = vperm.slane %v492, 0
      %v509 = vperm.slane %v493, 0
      %v510 = vperm.slane %v494, 0
      %v511 = vperm.slane %v495, 0
      %v512 = vperm.slane %v496, 0
      %v521 = vmul.f32 %v486, %v505
      %v522 = vmul.f32 %v487, %v505
      %v523 = vmul.f32 %v486, %v506
      %v524 = vmul.f32 %v487, %v506
      %v525 = vmul.f32 %v486, %v507
      %v526 = vmul.f32 %v487, %v507
      %v527 = vmul.f32 %v486, %v508
      %v528 = vmul.f32 %v487, %v508
      %v529 = vmul.f32 %v486, %v509
      %v530 = vmul.f32 %v487, %v509
      %v531 = vmul.f32 %v486, %v510
      %v532 = vmul.f32 %v487, %v510
      %v533 = vmul.f32 %v486, %v511
      %v534 = vmul.f32 %v487, %v511
      %v535 = vmul.f32 %v486, %v512
      %v536 = vmul.f32 %v487, %v512
      %v537 = vadd.f32 %v459, %v521
      %v538 = vadd.f32 %v460, %v522
      %v539 = vadd.f32 %v461, %v523
      %v540 = vadd.f32 %v462, %v524
      %v541 = vadd.f32 %v463, %v525
      %v542 = vadd.f32 %v464, %v526
      %v543 = vadd.f32 %v465, %v527
      %v544 = vadd.f32 %v466, %v528
      %v545 = vadd.f32 %v467, %v529
      %v546 = vadd.f32 %v468, %v530
      %v547 = vadd.f32 %v469, %v531
      %v548 = vadd.f32 %v470, %v532
      %v549 = vadd.f32 %v471, %v533
      %v550 = vadd.f32 %v472, %v534
      %v551 = vadd.f32 %v473, %v535
      %v552 = vadd.f32 %v474, %v536
      %vm553 = vcmask 523264
      %554 = vst.msk [vmem:[%s208] sm:$0xff] %vm553, %v537
      %555 = vst.msk [vmem:[%s208 + $0x8] sm:$0xff] %vm553, %v538
      %556 = vst.msk [vmem:[%s208 + $0x10] sm:$0xff] %vm553, %v539
      %557 = vst.msk [vmem:[%s208 + $0x18] sm:$0xff] %vm553, %v540
      %558 = vst.msk [vmem:[%s208 + $0x20] sm:$0xff] %vm553, %v541
      %559 = vst.msk [vmem:[%s208 + $0x28] sm:$0xff] %vm553, %v542
      %560 = vst.msk [vmem:[%s208 + $0x30] sm:$0xff] %vm553, %v543
      %561 = vst.msk [vmem:[%s208 + $0x38] sm:$0xff] %vm553, %v544
      %562 = vst.msk [vmem:[%s208 + $0x40] sm:$0xff] %vm553, %v545
      %563 = vst.msk [vmem:[%s208 + $0x48] sm:$0xff] %vm553, %v546
      %564 = vst.msk [vmem:[%s208 + $0x50] sm:$0xff] %vm553, %v547
      %565 = vst.msk [vmem:[%s208 + $0x58] sm:$0xff] %vm553, %v548
      %566 = vst.msk [vmem:[%s208 + $0x60] sm:$0xff] %vm553, %v549
      %567 = vst.msk [vmem:[%s208 + $0x68] sm:$0xff] %vm553, %v550
      %568 = vst.msk [vmem:[%s208 + $0x70] sm:$0xff] %vm553, %v551
      %569 = vst.msk [vmem:[%s208 + $0x78] sm:$0xff] %vm553, %v552
      %s570 = smul.u32 2, %s19
      %p571 = scmp.lt.s32.totalorder %s18, 1
      %s572 = scalar_select %p571, %s18, 1
      %p573 = scmp.lt.s32.totalorder %s570, 1
      %s574 = scalar_select %p573, %s570, 1
      %s575 = smul.addr %s572, 16
      %s576 = sadd.s32 %s574, %s575
      %s577 = smul.addr %s576, 8
      %s578 = scalar_lea.vmem %s3, %s577
      // Predicated region
      $region33: #{up_conv_pallas.1} parent=31 // pred_check
        %p579 = pneg %p116
      $region34: #{up_conv_pallas.1} parent=31 // pred_check_branch
        %581 = sbr.rel (%p579) target = $region36
      $region35: #{up_conv_pallas.1} parent=31 // pred_region
        %s582 = smul.u32 2, %s19
      $region36: #{up_conv_pallas.1} parent=31 // pred_fallthru
        _
    $region32: #{up_conv_pallas.1} parent=5 // pred_fallthru
      _
    %p583 = scmp.le.s32.totalorder 2, %s9
    // Predicated region
    $region37: #{up_conv_pallas.1} parent=5 // pred_check
      %p584 = pneg %p583
    $region38: #{up_conv_pallas.1} parent=5 // pred_check_branch
      %586 = sbr.rel (%p584) target = $region40
    $region39: #{up_conv_pallas.1} parent=5 // pred_region
      %s587 = ssub.s32 %s9, 2
      // Predicated region
      $region41: #{up_conv_pallas.1} parent=39 // pred_check
        %p588 = pneg %p122
      $region42: #{up_conv_pallas.1} parent=39 // pred_check_branch
        %590 = sbr.rel (%p588) target = $region44
      $region43: #{up_conv_pallas.1} parent=39 // pred_region
        %s591 = smul.u32 2, %s21
        %p592 = scmp.lt.s32.totalorder %s20, 1
        %s593 = scalar_select %p592, %s20, 1
        %p594 = scmp.lt.s32.totalorder %s591, 1
        %s595 = scalar_select %p594, %s591, 1
        %s596 = smul.addr %s593, 16
        %s597 = sadd.s32 %s595, %s596
        %s598 = smul.addr %s597, 8
        %s599 = scalar_lea.vmem %s3, %s598
      $region44: #{up_conv_pallas.1} parent=39 // pred_fallthru
        _
    $region40: #{up_conv_pallas.1} parent=5 // pred_fallthru
      _
  $region6: #{up_conv_pallas.1} parent=0 // loop_footer
    %s13 = sadd.s32 1, %s9
  $region7: #{up_conv_pallas.1} parent=0 // loop_footer_branch
    %8 = sbr.rel target = $region3
  $region8: #{up_conv_pallas.1} parent=0 // loop_exit
    _

</llo_original>
